<compile_context>
chip_gen: v5e
topology: v5e:2x2
jax: 0.10.0
libtpu: 0.0.40
codegen_flags: <defaults>
</compile_context>

<pallas_src>
import math

import jax
import jax.numpy as jnp
from jax.experimental import pallas as pl
from jax.experimental.pallas import tpu as pltpu


# --------------------------------------------------------------------------
# Kernels
# --------------------------------------------------------------------------
def _pos_enc_kernel(x_ref, pe_ref, o_ref):
    # x_ref : (TS, B, D) tile of activations
    # pe_ref: (TS, 1, D) positional rows; size-1 B dim -> free sublane
    #         broadcast fused into the single VPU add (no relayout).
    o_ref[...] = x_ref[...] + pe_ref[...]


def _pos_enc_kernel_2d(x_ref, pe_ref, o_ref):
    # Lane-dense path: x_ref/o_ref are (TS, B*D) views, pe_ref is pre-tiled
    # over B in the wrapper, so this is a plain full-width VPU add.
    o_ref[...] = x_ref[...] + pe_ref[...]


# --------------------------------------------------------------------------
# PE table (identical math to the PyTorch __init__ buffer, kept in f32)
# --------------------------------------------------------------------------
def make_pe(max_len, d_model):
    """sin/cos table of shape (max_len, d_model), float32 like the PyTorch
    buffer.  Cast to x.dtype happens in the wrapper (documented deviation for
    bf16 activations)."""
    assert d_model % 2 == 0, "d_model must be even (same assumption as the PyTorch module)"
    position = jnp.arange(0, max_len, dtype=jnp.float32)[:, None]            # (L, 1)
    div_term = jnp.exp(
        jnp.arange(0, d_model, 2, dtype=jnp.float32) * (-math.log(10000.0) / d_model)
    )                                                                         # (D/2,)
    pe = jnp.zeros((max_len, d_model), dtype=jnp.float32)
    pe = pe.at[:, 0::2].set(jnp.sin(position * div_term))
    pe = pe.at[:, 1::2].set(jnp.cos(position * div_term))
    return pe


# --------------------------------------------------------------------------
# Generation-aware tiling
# --------------------------------------------------------------------------
def _tpu_budget_and_cores():
    """(per-step VMEM tile budget in bytes, TensorCores per device).

    Budgets stay under each generation's *default* scoped-VMEM limit
    (16 MiB v5e, 32 MiB v6e/v7x) so no vmem_limit override is needed.
    """
    try:
        kind = jax.devices()[0].device_kind.lower()
    except Exception:
        kind = ""
    if ("v5 lite" in kind) or ("v5e" in kind) or ("v5lite" in kind):
        return 12 * 1024 * 1024, 1          # v5e: 16 MiB default scoped VMEM
    if "v7" in kind:
        return 24 * 1024 * 1024, 2          # v7x: 2 TCs, 32 MiB default scoped VMEM
    if ("v6" in kind) or ("trillium" in kind):
        return 24 * 1024 * 1024, 1          # v6e: 1 TC, 32 MiB default scoped VMEM
    return 12 * 1024 * 1024, 1              # unknown: be conservative


def _choose_seq_tile(S, per_row_bytes, budget_bytes, num_cores=1, row_multiple=1):
    """Rows of the sequence axis per grid step.

    per_row_bytes already accounts for double-buffering of every operand.
    row_multiple is the sublane-layout constraint on the tile's leading dim
    (8 for the 2-D lane-dense path, 1 for the 3-D path where the (B, D)
    inner block equals the full array dims).  Returns None if even a
    minimal legal tile exceeds the budget.
    """
    max_rows = (budget_bytes // per_row_bytes) // row_multiple * row_multiple
    if max_rows < row_multiple:
        return None
    # Minimal step count that fits the budget.
    n_steps = max(1, pl.cdiv(S, max_rows))
    # v7x: make the "parallel" grid axis split evenly across both TCs.
    if num_cores > 1 and S >= 16:
        n_steps = pl.cdiv(n_steps, num_cores) * num_cores
    while True:
        ts = pl.cdiv(pl.cdiv(S, n_steps), row_multiple) * row_multiple
        if ts <= max_rows:
            return min(ts, S)
        n_steps += num_cores if num_cores > 1 else 1


# --------------------------------------------------------------------------
# Wrapper
# --------------------------------------------------------------------------
def positional_encoding(x, pe):
    """x: (S, B, D); pe: (max_len, D) from make_pe.  Returns x + pe[:S]
    broadcast over B.  Dropout(p=0.0) is the identity."""
    S, B, D = x.shape
    assert S <= pe.shape[0] and D == pe.shape[1]
    itemsize = jnp.dtype(x.dtype).itemsize
    budget, num_cores = _tpu_budget_and_cores()

    # ---- Lane-dense path: D doesn't fill the 128-wide lane dim but B*D does.
    # Present x/out as (S, B*D) (free row-major reshape) and pre-tile pe over
    # B; the extra pe read bytes only happen in this small-D regime and avoid
    # masked narrow stores.
    if D % 128 != 0 and (B * D) % 128 == 0:
        per_row = 6 * B * D * itemsize           # 2x(x) + 2x(out) + 2x(pe tiled)
        ts = _choose_seq_tile(S, per_row, budget, num_cores, row_multiple=8)
        if ts is not None:
            x2 = x.reshape(S, B * D)
            pe_row = jnp.tile(pe[:S].astype(x.dtype), (1, B))     # (S, B*D)
            out2 = pl.pallas_call(
                _pos_enc_kernel_2d,
                out_shape=jax.ShapeDtypeStruct((S, B * D), x.dtype),
                grid=(pl.cdiv(S, ts),),
                in_specs=[
                    pl.BlockSpec((ts, B * D), lambda i: (i, 0)),
                    pl.BlockSpec((ts, B * D), lambda i: (i, 0)),
                ],
                out_specs=pl.BlockSpec((ts, B * D), lambda i: (i, 0)),
                compiler_params=pltpu.CompilerParams(
                    dimension_semantics=("parallel",),
                ),
            )(x2, pe_row)
            return out2.reshape(S, B, D)

    # ---- Generic path: (S, B, D) tiles, pe as (S, 1, D) so the B-broadcast
    # is a free sublane broadcast inside the single VPU add.
    pe_s = pe[:S].astype(x.dtype)[:, None, :]                      # (S, 1, D)
    per_row = (4 * B * D + 2 * D) * itemsize      # 2x(x) + 2x(out) + 2x(pe)
    ts = _choose_seq_tile(S, per_row, budget, num_cores, row_multiple=1)
    if ts is None:
        ts = 1   # one row per step; legal since (B, D) equal full array dims
    return pl.pallas_call(
        _pos_enc_kernel,
        out_shape=jax.ShapeDtypeStruct((S, B, D), x.dtype),
        grid=(pl.cdiv(S, ts),),
        in_specs=[
            pl.BlockSpec((ts, B, D), lambda i: (i, 0, 0)),
            pl.BlockSpec((ts, 1, D), lambda i: (i, 0, 0)),
        ],
        out_specs=pl.BlockSpec((ts, B, D), lambda i: (i, 0, 0)),
        compiler_params=pltpu.CompilerParams(
            dimension_semantics=("parallel",),
        ),
    )(x, pe_s)


# --------------------------------------------------------------------------
# Self-test
# --------------------------------------------------------------------------
if __name__ == "__main__":
    d_model, max_len = 32, 30
    pe = make_pe(max_len, d_model)
    key = jax.random.PRNGKey(0)
    k1, k2 = jax.random.split(key)

    # 1) Toy shape implied by the module (generic 3-D path): (S, B, D) = (8, 2, 32)
    S, B = 8, 2
    x = jax.random.normal(k1, (S, B, d_model), dtype=jnp.float32)
    out = jax.block_until_ready(positional_encoding(x, pe))
    ref = x + pe[:S][:, None, :]
    assert out.shape == x.shape
    assert jnp.allclose(out, ref, atol=1e-6), "mismatch vs reference (3-D path)"

    # 2) Lane-dense flatten path (B*D == 128): (S, B, D) = (16, 4, 32)
    S2, B2 = 16, 4
    x2 = jax.random.normal(k2, (S2, B2, d_model), dtype=jnp.float32)
    out2 = jax.block_until_ready(positional_encoding(x2, pe))
    ref2 = x2 + pe[:S2][:, None, :]
    assert out2.shape == x2.shape
    assert jnp.allclose(out2, ref2, atol=1e-6), "mismatch vs reference (lane-dense path)"

    print("KERNEL_OK")
</pallas_src>

<mosaic_0001>
module attributes {stable_mosaic.version = 11 : i64} {
  func.func @_pos_enc_kernel(%arg0: i32, %arg1: memref<8x2x32xf32, #tpu.memory_space<vmem>>, %arg2: memref<8x1x32xf32, #tpu.memory_space<vmem>>, %arg3: memref<8x2x32xf32, #tpu.memory_space<vmem>>) attributes {dimension_semantics = [#tpu.dimension_semantics<parallel>], iteration_bounds = array<i64: 1>, scalar_prefetch = 0 : i64, scratch_operands = 0 : i64, tpu.core_type = #tpu.core_type<tc>, window_params = [{transform_indices = @transform_0, window_bounds = array<i64: 8, 2, 32>}, {transform_indices = @transform_1, window_bounds = array<i64: 8, 1, 32>}, {transform_indices = @transform_2, window_bounds = array<i64: 8, 2, 32>}]} {
    %c0 = arith.constant 0 : index
    %c0_0 = arith.constant 0 : index
    %c0_1 = arith.constant 0 : index
    %0 = vector.load %arg1[%c0, %c0_0, %c0_1] : memref<8x2x32xf32, #tpu.memory_space<vmem>>, vector<8x2x32xf32>
    %c0_2 = arith.constant 0 : index
    %c0_3 = arith.constant 0 : index
    %c0_4 = arith.constant 0 : index
    %1 = vector.load %arg2[%c0_2, %c0_3, %c0_4] : memref<8x1x32xf32, #tpu.memory_space<vmem>>, vector<8x1x32xf32>
    %2 = vector.broadcast %1 : vector<8x1x32xf32> to vector<8x2x32xf32>
    %3 = arith.addf %0, %2 : vector<8x2x32xf32>
    %c0_5 = arith.constant 0 : index
    %c0_6 = arith.constant 0 : index
    %c0_7 = arith.constant 0 : index
    %4 = vector.load %arg3[%c0_5, %c0_6, %c0_7] : memref<8x2x32xf32, #tpu.memory_space<vmem>>, vector<8x2x32xf32>
    tpu.vector_store %arg3[%c0_5, %c0_6, %c0_7], %3 {strides = array<i32>} : memref<8x2x32xf32, #tpu.memory_space<vmem>>, vector<8x2x32xf32>,
    return
  }
  func.func @transform_0(%arg0: i32) -> (i32, i32, i32) {
    %c0_i32 = arith.constant 0 : i32
    %c0_i32_0 = arith.constant 0 : i32
    %c0_i32_1 = arith.constant 0 : i32
    return %arg0, %c0_i32, %c0_i32_0 : i32, i32, i32
  }
  func.func @transform_1(%arg0: i32) -> (i32, i32, i32) {
    %c0_i32 = arith.constant 0 : i32
    %c0_i32_0 = arith.constant 0 : i32
    %c0_i32_1 = arith.constant 0 : i32
    return %arg0, %c0_i32, %c0_i32_0 : i32, i32, i32
  }
  func.func @transform_2(%arg0: i32) -> (i32, i32, i32) {
    %c0_i32 = arith.constant 0 : i32
    %c0_i32_0 = arith.constant 0 : i32
    %c0_i32_1 = arith.constant 0 : i32
    return %arg0, %c0_i32, %c0_i32_0 : i32, i32, i32
  }
}

</mosaic_0001>

<llo_original>
// kernel: tpu_custom_call.1
$region0: #{tpu_custom_call.1}
  #allocation0 [shape = 'u32[]', space=smem, size = 0x4, offset = 0x4, fixed_abs, tag = 'smem constant byte address 0x4 - core index']
  #allocation1 [shape = 'u32[72,128]{1,0:T(1,128)}', space=vmem, size = 0x9000, scoped, tag = 'internal scratch']
  %s0 = inlined_call_operand.hbm [shape: f32[8,2,32], index: 0, kind: input, shape index: {}]
  %s1 = inlined_call_operand.hbm [shape: f32[8,1,32], index: 1, kind: input, shape index: {}]
  %s2 = inlined_call_operand.hbm [shape: f32[8,2,32], index: 2, kind: output, shape index: {}]
  %s3 = sld [smem:[#allocation0]]
  $region26: #{tpu_custom_call.1} parent=0
    _
  %s5 = ssub.s32 1, %s3
  %s6 = scalar_select 0, %s5, %s3
  $region1: #{tpu_custom_call.1} parent=0
    #allocation2 [shape = 'u8[8192]{0}', space=vmem, size = 0x2000, scoped, tag = 'input window, operand 0, single buffered']
    #allocation3 [shape = 's32[1]{0}', space=sflag, size = 0x4, scoped, tag = 'scoped memory for tpu_custom_call.1']
    #allocation4 [shape = 's32[1]{0}', space=sflag, size = 0x4, scoped, tag = 'scoped memory for tpu_custom_call.1']
    #allocation5 [shape = 'u8[4096]{0}', space=vmem, size = 0x1000, scoped, tag = 'input window, operand 1, single buffered']
    #allocation6 [shape = 's32[1]{0}', space=sflag, size = 0x4, scoped, tag = 'scoped memory for tpu_custom_call.1']
    #allocation7 [shape = 'u8[8192]{0}', space=vmem, size = 0x2000, scoped, tag = 'output window, operand 0, single buffered']
    %7 = vsyncpa [#allocation3], 0
    %8 = vsyncpa [#allocation6], 0
    %9 = vsyncpa [#allocation4], 0
    // Predicated region
    $region2: #{tpu_custom_call.1} parent=1 // pred_check
      _
    $region3: #{tpu_custom_call.1} parent=1 // pred_check_branch
      %11 = sbr.rel (0) target = $region5
    $region4: #{tpu_custom_call.1} parent=1 // pred_region
      %13 = vsyncadd [#allocation3], 0
      %s14 = sshll.u32 %s0, 4
      %s15 = int_to_ptr.hbm [resolvable:$true] %s14
      %s16 = sshll.u32 [#allocation2], 4
      %s17 = int_to_ptr.vmem [resolvable:$true] %s16
      %22 = dma.hbm_to_vmem [thread:$0]  %s15, 256, %s17, [#allocation3], 32, 32, 2
    $region5: #{tpu_custom_call.1} parent=1 // pred_fallthru
      _
    // Predicated region
    $region6: #{tpu_custom_call.1} parent=1 // pred_check
      _
    $region7: #{tpu_custom_call.1} parent=1 // pred_check_branch
      %24 = sbr.rel (0) target = $region9
    $region8: #{tpu_custom_call.1} parent=1 // pred_region
      %26 = vsyncadd [#allocation6], 0
      %s27 = sshll.u32 %s1, 4
      %s28 = int_to_ptr.hbm [resolvable:$true] %s27
      %s29 = sshll.u32 [#allocation5], 4
      %s30 = int_to_ptr.vmem [resolvable:$true] %s29
      %35 = dma.hbm_to_vmem [thread:$0]  %s28, 128, %s30, [#allocation6], 16, 16, 1
    $region9: #{tpu_custom_call.1} parent=1 // pred_fallthru
      _
    // Predicated region
    $region10: #{tpu_custom_call.1} parent=1 // pred_check
      _
    $region11: #{tpu_custom_call.1} parent=1 // pred_check_branch
      %37 = sbr.rel (0) target = $region13
    $region12: #{tpu_custom_call.1} parent=1 // pred_region
      %39 = dma.done [#allocation3], 256
    $region13: #{tpu_custom_call.1} parent=1 // pred_fallthru
      _
    // Predicated region
    $region14: #{tpu_custom_call.1} parent=1 // pred_check
      _
    $region15: #{tpu_custom_call.1} parent=1 // pred_check_branch
      %41 = sbr.rel (0) target = $region17
    $region16: #{tpu_custom_call.1} parent=1 // pred_region
      %43 = dma.done [#allocation6], 128
    $region17: #{tpu_custom_call.1} parent=1 // pred_fallthru
      _
    %v44 = vld [vmem:[#allocation2] sm:$0x3]
    %v45 = vld [vmem:[#allocation2 + $0x2] sm:$0x3]
    %v46 = vld [vmem:[#allocation2 + $0x4] sm:$0x3]
    %v47 = vld [vmem:[#allocation2 + $0x6] sm:$0x3]
    %v48 = vld [vmem:[#allocation2 + $0x8] sm:$0x3]
    %v49 = vld [vmem:[#allocation2 + $0xa] sm:$0x3]
    %v50 = vld [vmem:[#allocation2 + $0xc] sm:$0x3]
    %v51 = vld [vmem:[#allocation2 + $0xe] sm:$0x3]
    %v52 = vld [vmem:[#allocation5] sm:$0x1]
    %v53 = vld [vmem:[#allocation5 + $0x1] sm:$0x1]
    %v54 = vld [vmem:[#allocation5 + $0x2] sm:$0x1]
    %v55 = vld [vmem:[#allocation5 + $0x3] sm:$0x1]
    %v56 = vld [vmem:[#allocation5 + $0x4] sm:$0x1]
    %v57 = vld [vmem:[#allocation5 + $0x5] sm:$0x1]
    %v58 = vld [vmem:[#allocation5 + $0x6] sm:$0x1]
    %v59 = vld [vmem:[#allocation5 + $0x7] sm:$0x1]
    %v68 = vperm.slane %v52, 0
    %v69 = vperm.slane %v53, 0
    %v70 = vperm.slane %v54, 0
    %v71 = vperm.slane %v55, 0
    %v72 = vperm.slane %v56, 0
    %v73 = vperm.slane %v57, 0
    %v74 = vperm.slane %v58, 0
    %v75 = vperm.slane %v59, 0
    %v84 = vadd.f32 %v44, %v68
    %v85 = vadd.f32 %v45, %v69
    %v86 = vadd.f32 %v46, %v70
    %v87 = vadd.f32 %v47, %v71
    %v88 = vadd.f32 %v48, %v72
    %v89 = vadd.f32 %v49, %v73
    %v90 = vadd.f32 %v50, %v74
    %v91 = vadd.f32 %v51, %v75
    %vm92 = vcmask 254976
    %93 = vst.msk [vmem:[#allocation7] sm:$0x3] %vm92, %v84
    %94 = vst.msk [vmem:[#allocation7 + $0x2] sm:$0x3] %vm92, %v85
    %95 = vst.msk [vmem:[#allocation7 + $0x4] sm:$0x3] %vm92, %v86
    %96 = vst.msk [vmem:[#allocation7 + $0x6] sm:$0x3] %vm92, %v87
    %97 = vst.msk [vmem:[#allocation7 + $0x8] sm:$0x3] %vm92, %v88
    %98 = vst.msk [vmem:[#allocation7 + $0xa] sm:$0x3] %vm92, %v89
    %99 = vst.msk [vmem:[#allocation7 + $0xc] sm:$0x3] %vm92, %v90
    %100 = vst.msk [vmem:[#allocation7 + $0xe] sm:$0x3] %vm92, %v91
    // Predicated region
    $region18: #{tpu_custom_call.1} parent=1 // pred_check
      _
    $region19: #{tpu_custom_call.1} parent=1 // pred_check_branch
      %102 = sbr.rel (0) target = $region21
    $region20: #{tpu_custom_call.1} parent=1 // pred_region
      %104 = vsyncadd [#allocation4], 0
      %s105 = sshll.u32 [#allocation7], 4
      %s106 = int_to_ptr.vmem [resolvable:$true] %s105
      %s107 = sshll.u32 %s2, 4
      %s108 = int_to_ptr.hbm [resolvable:$true] %s107
      %113 = dma.vmem_to_hbm [thread:$0]  %s106, 256, %s108, [#allocation4], 32, 32, 2
    $region21: #{tpu_custom_call.1} parent=1 // pred_fallthru
      _
    // Predicated region
    $region22: #{tpu_custom_call.1} parent=1 // pred_check
      _
    $region23: #{tpu_custom_call.1} parent=1 // pred_check_branch
      %115 = sbr.rel (0) target = $region25
    $region24: #{tpu_custom_call.1} parent=1 // pred_region
      %117 = dma.done [#allocation4], 256
    $region25: #{tpu_custom_call.1} parent=1 // pred_fallthru
      _
    %118 = vsyncpa [#allocation3], 1
    %119 = vsyncpa [#allocation6], 1
    %120 = vsyncpa [#allocation4], 1

</llo_original>
